<compile_context>
chip_gen: v7x
topology: tpu7x:2x2x1
jax: 0.10.0
libtpu: 0.0.40
codegen_flags: <defaults>
</compile_context>

<pallas_src>
import jax
import jax.numpy as jnp
from jax.experimental import pallas as pl
from jax.experimental.pallas import tpu as pltpu


def _round_up(a: int, b: int) -> int:
    return (a + b - 1) // b * b


def _fact_reduce_kernel(x_ref, w_ref, shift_ref, o_ref):
    # x_ref:     (2*C_in, tpix)   stride-2-gathered pixels, channels on sublanes
    # w_ref:     (C_out, 2*C_in)  block-diag [W1|0 ; 0|W2], BN scale folded in
    # shift_ref: (C_out, 1)       BN shift (f32)
    # o_ref:     (C_out, tpix)
    a = jnp.maximum(x_ref[...], 0).astype(w_ref.dtype)               # fused ReLU (VPU)
    y = jnp.dot(w_ref[...], a, preferred_element_type=jnp.float32)   # both convs + concat (MXU)
    o_ref[...] = (y + shift_ref[...]).astype(o_ref.dtype)            # fused BN shift


def factorized_reduce(x, w1, w2, gamma, beta, running_mean, running_var, eps=1e-5):
    """FactorizedReduce forward.

    x:      (N, C_in, H, W) NCHW, H and W even.
    w1, w2: (C_out//2, C_in) 1x1 conv weights (kernel dims squeezed).
    gamma, beta, running_mean, running_var: (C_out,) BatchNorm parameters.
    Returns (N, C_out, H//2, W//2) in x.dtype.
    """
    n, c_in, h, w = x.shape
    c_half = w1.shape[0]
    c_out = 2 * c_half
    assert h % 2 == 0 and w % 2 == 0, "FactorizedReduce requires even H, W"
    h2, w2_ = h // 2, w // 2
    m_n = h2 * w2_

    dtype = x.dtype
    f32 = jnp.float32

    # Stride-2 gathered views, channel-stacked: (N, 2*C_in, H2*W2).  XLA fuses
    # the two strided slices + concat (+ pad) into a single copy; the kernel
    # then reads/writes everything exactly once, directly in NCHW layout.
    # TODO(synk): express the stride-2 gather with in-kernel strided DMAs
    # (memory_space=pl.ANY) to remove this remaining wrapper-side copy.
    x1 = x[:, :, 0::2, 0::2].reshape(n, c_in, m_n)
    x2 = x[:, :, 1::2, 1::2].reshape(n, c_in, m_n)
    x_cat = jnp.concatenate([x1, x2], axis=1)          # (N, 2*C_in, m_n)

    # Pixel (lane) tiling.  Large maps: pad the lane dim to a multiple of 128
    # and tile at <=512 lanes (safe on 16/32 MiB scoped VMEM, ~roofline on
    # v6e).  Small maps: use the full dim as a single block (allowed by the
    # (8,128) rule) so there is no padding and no de-pad copy at all.
    if m_n % 128 == 0 or m_n >= 512:
        m_pad = _round_up(m_n, 128)
        tpix = next(t for t in (512, 256, 128) if m_pad % t == 0)
        if m_pad != m_n:
            x_cat = jnp.pad(x_cat, ((0, 0), (0, 0), (0, m_pad - m_n)))
    else:
        m_pad = m_n
        tpix = m_n

    # Fold BN (running-stats form) into the weights:
    #   (W @ relu(x)) * scale + shift == (scale[:,None] * W) @ relu(x) + shift
    # TODO(synk): training-mode BatchNorm (batch statistics) would need a
    # cross-tile two-pass reduction; inference-mode BN is fused here.
    scale = gamma.astype(f32) / jnp.sqrt(running_var.astype(f32) + eps)
    shift = (beta.astype(f32) - running_mean.astype(f32) * scale)[:, None]
    w_cat = jnp.zeros((c_out, 2 * c_in), f32)
    w_cat = w_cat.at[:c_half, :c_in].set(w1.astype(f32))
    w_cat = w_cat.at[c_half:, c_in:].set(w2.astype(f32))
    w_cat = (w_cat * scale[:, None]).astype(dtype)

    grid = (n, m_pad // tpix)

    out = pl.pallas_call(
        _fact_reduce_kernel,
        out_shape=jax.ShapeDtypeStruct((n, c_out, m_pad), dtype),
        grid_spec=pltpu.PrefetchScalarGridSpec(
            num_scalar_prefetch=0,
            grid=grid,
            in_specs=[
                # gathered activations: one image, one pixel tile per step
                pl.BlockSpec((None, 2 * c_in, tpix), lambda b, p: (b, 0, p)),
                # fused block-diagonal conv weight (BN scale folded), resident
                pl.BlockSpec((c_out, 2 * c_in), lambda b, p: (0, 0)),
                # BN shift, resident
                pl.BlockSpec((c_out, 1), lambda b, p: (0, 0)),
            ],
            out_specs=pl.BlockSpec((None, c_out, tpix), lambda b, p: (b, 0, p)),
        ),
        compiler_params=pltpu.CompilerParams(
            dimension_semantics=("parallel", "parallel"),
        ),
    )(x_cat, w_cat, shift)

    if m_pad != m_n:
        out = out[:, :, :m_n]
    return out.reshape(n, c_out, h2, w2_)


def _reference(x, w1, w2, gamma, beta, mean, var, eps=1e-5):
    xr = jnp.maximum(x, 0.0)
    x1 = xr[:, :, 0::2, 0::2]
    x2 = xr[:, :, 1::2, 1::2]
    y1 = jnp.einsum('nchw,oc->nohw', x1, w1)
    y2 = jnp.einsum('nchw,oc->nohw', x2, w2)
    y = jnp.concatenate([y1, y2], axis=1)
    scale = gamma / jnp.sqrt(var + eps)
    shift = beta - mean * scale
    return y * scale[None, :, None, None] + shift[None, :, None, None]


if __name__ == "__main__":
    key = jax.random.PRNGKey(0)
    k1, k2, k3, k4, k5 = jax.random.split(key, 5)
    n, c_in, h, w = 2, 4, 16, 16
    c_out = 8

    x = jax.random.normal(k1, (n, c_in, h, w), dtype=jnp.float32)
    w1 = 0.1 * jax.random.normal(k2, (c_out // 2, c_in), dtype=jnp.float32)
    w2 = 0.1 * jax.random.normal(k3, (c_out // 2, c_in), dtype=jnp.float32)
    gamma = 1.0 + 0.1 * jax.random.normal(k4, (c_out,), dtype=jnp.float32)
    beta = 0.1 * jax.random.normal(k5, (c_out,), dtype=jnp.float32)
    running_mean = jnp.zeros((c_out,), jnp.float32)
    running_var = jnp.ones((c_out,), jnp.float32)

    y = factorized_reduce(x, w1, w2, gamma, beta, running_mean, running_var)
    jax.block_until_ready(y)

    assert y.shape == (n, c_out, h // 2, w // 2), y.shape
    assert y.dtype == x.dtype, y.dtype
    y_ref = _reference(x, w1, w2, gamma, beta, running_mean, running_var)
    assert jnp.allclose(y, y_ref, atol=1e-2, rtol=1e-2), float(
        jnp.max(jnp.abs(y - y_ref)))
    print("KERNEL_OK")
</pallas_src>

<mosaic_0001>
module attributes {stable_mosaic.version = 11 : i64} {
  func.func @_fact_reduce_kernel(%arg0: i32, %arg1: i32, %arg2: memref<1x8x64xf32, #tpu.memory_space<vmem>>, %arg3: memref<8x8xf32, #tpu.memory_space<vmem>>, %arg4: memref<8x1xf32, #tpu.memory_space<vmem>>, %arg5: memref<1x8x64xf32, #tpu.memory_space<vmem>>) attributes {dimension_semantics = [#tpu.dimension_semantics<parallel>, #tpu.dimension_semantics<parallel>], iteration_bounds = array<i64: 2, 1>, scalar_prefetch = 0 : i64, scratch_operands = 0 : i64, tpu.core_type = #tpu.core_type<tc>, window_params = [{transform_indices = @transform_0, window_bounds = array<i64: 1, 8, 64>}, {pipeline_mode = #tpu.pipeline_mode<synchronous>, transform_indices = @transform_1, window_bounds = array<i64: 8, 8>}, {pipeline_mode = #tpu.pipeline_mode<synchronous>, transform_indices = @transform_2, window_bounds = array<i64: 8, 1>}, {transform_indices = @transform_3, window_bounds = array<i64: 1, 8, 64>}]} {
    %c0 = arith.constant 0 : index
    %c0_0 = arith.constant 0 : index
    %c0_1 = arith.constant 0 : index
    %0 = vector.load %arg2[%c0, %c0_0, %c0_1] : memref<1x8x64xf32, #tpu.memory_space<vmem>>, vector<1x8x64xf32>
    %1 = vector.shape_cast %0 : vector<1x8x64xf32> to vector<8x64xf32>
    %cst = arith.constant 0.000000e+00 : f32
    %2 = vector.broadcast %cst : f32 to vector<8x64xf32>
    %3 = arith.maximumf %1, %2 : vector<8x64xf32>
    %c0_2 = arith.constant 0 : index
    %c0_3 = arith.constant 0 : index
    %4 = vector.load %arg3[%c0_2, %c0_3] : memref<8x8xf32, #tpu.memory_space<vmem>>, vector<8x8xf32>
    %cst_4 = arith.constant dense<0.000000e+00> : vector<8x64xf32>
    %5 = tpu.matmul %4, %3, %cst_4 {dimension_numbers = #tpu.dot_dimension_numbers<[1], [0], [0], [1], [0, 0, 1, 1], [], []>} : vector<8x8xf32>, vector<8x64xf32>, vector<8x64xf32> -> vector<8x64xf32>
    %c0_5 = arith.constant 0 : index
    %c0_6 = arith.constant 0 : index
    %6 = vector.load %arg4[%c0_5, %c0_6] : memref<8x1xf32, #tpu.memory_space<vmem>>, vector<8x1xf32>
    %7 = vector.broadcast %6 : vector<8x1xf32> to vector<8x64xf32>
    %8 = arith.addf %5, %7 : vector<8x64xf32>
    %c0_7 = arith.constant 0 : index
    %c0_8 = arith.constant 0 : index
    %c0_9 = arith.constant 0 : index
    %9 = vector.load %arg5[%c0_7, %c0_8, %c0_9] : memref<1x8x64xf32, #tpu.memory_space<vmem>>, vector<1x8x64xf32>
    %10 = vector.shape_cast %9 : vector<1x8x64xf32> to vector<8x64xf32>
    %11 = vector.shape_cast %8 : vector<8x64xf32> to vector<1x8x64xf32>
    tpu.vector_store %arg5[%c0_7, %c0_8, %c0_9], %11 {strides = array<i32>} : memref<1x8x64xf32, #tpu.memory_space<vmem>>, vector<1x8x64xf32>,
    return
  }
  func.func @transform_0(%arg0: i32, %arg1: i32) -> (i32, i32, i32) {
    %c0_i32 = arith.constant 0 : i32
    %c0_i32_0 = arith.constant 0 : i32
    return %arg0, %c0_i32, %arg1 : i32, i32, i32
  }
  func.func @transform_1(%arg0: i32, %arg1: i32) -> (i32, i32) {
    %c0_i32 = arith.constant 0 : i32
    %c0_i32_0 = arith.constant 0 : i32
    %c0_i32_1 = arith.constant 0 : i32
    return %c0_i32, %c0_i32_0 : i32, i32
  }
  func.func @transform_2(%arg0: i32, %arg1: i32) -> (i32, i32) {
    %c0_i32 = arith.constant 0 : i32
    %c0_i32_0 = arith.constant 0 : i32
    %c0_i32_1 = arith.constant 0 : i32
    return %c0_i32, %c0_i32_0 : i32, i32
  }
  func.func @transform_3(%arg0: i32, %arg1: i32) -> (i32, i32, i32) {
    %c0_i32 = arith.constant 0 : i32
    %c0_i32_0 = arith.constant 0 : i32
    return %arg0, %c0_i32, %arg1 : i32, i32, i32
  }
}

</mosaic_0001>

<llo_original>
// kernel: tpu_custom_call.1
$region0: #{tpu_custom_call.1}
  #allocation0 [shape = 'u32[]', space=smem, size = 0x4, offset = 0x4, fixed_abs, tag = 'smem constant byte address 0x4 - core index']
  #allocation1 [shape = 'u32[144,128]{1,0:T(1,128)}', space=vmem, size = 0x12000, scoped, tag = 'internal scratch']
  %s0 = inlined_call_operand.hbm [shape: f32[2,8,64], index: 0, kind: input, shape index: {}]
  %s1 = inlined_call_operand.vmem [shape: f32[8,8], index: 1, kind: input, shape index: {}]
  %s2 = inlined_call_operand.vmem [shape: f32[8,1], index: 2, kind: input, shape index: {}]
  %s3 = inlined_call_operand.hbm [shape: f32[2,8,64], index: 3, kind: output, shape index: {}]
  %s4 = sld [smem:[#allocation0]]
  $region49: #{tpu_custom_call.1} parent=0
    _
  %s6 = ssub.s32 1, %s4
  %s7 = scalar_select 0, %s6, %s4
  $region1: #{tpu_custom_call.1} parent=0
    #allocation2 [shape = 'u8[8192]{0}', space=vmem, size = 0x2000, scoped, tag = 'input window, operand 0']
    #allocation3 [shape = 's32[2]{0}', space=sflag, size = 0x8, scoped, tag = 'scoped memory for tpu_custom_call.1']
    #allocation4 [shape = 's32[2]{0}', space=sflag, size = 0x8, scoped, tag = 'scoped memory for tpu_custom_call.1']
    #allocation5 [shape = 'u8[8192]{0}', space=vmem, size = 0x2000, scoped, tag = 'output window, operand 0']
    %8 = vsyncpa [#allocation3], 0
    %s9 = scalar_lea.sflag [#allocation3], 1
    %10 = vsyncpa %s9, 0
    %11 = vsyncpa [#allocation4], 0
    %s12 = scalar_lea.sflag [#allocation4], 1
    %13 = vsyncpa %s12, 0
    loop: start=0, step=1, limit=4
    $region2: #{tpu_custom_call.1} parent=1 // loop_pre_header
      _
    $region3: #{tpu_custom_call.1} parent=1 // loop_header
      %s15 = sphi 0, %s19
      %p16 = scmp.ge.s32.totalorder %s15, 4
      %s22 = sphi 0, %s34
      %s23 = sphi 0, %s30
      %s24 = sphi 0, %s22
      %s25 = sphi 0, %s23
      %s26 = sphi 0, %s24
      %s27 = sphi 0, %s25
      %s39 = sphi 0, %s41
      %s42 = sphi 0, %s39
      %s43 = sphi 0, %s42
      %s59 = sphi 0, %s43
      %s63 = sphi 0, %s63
      %s65 = sphi 0, %s63
      %s66 = sphi 0, %s65
      %s80 = sphi 0, %s66
      %s84 = sphi 0, %s84
      %s86 = sphi 0, %s84
      %s87 = sphi 0, %s86
      %s101 = sphi 0, %s87
      %s109 = sphi 0, %s111
      %s112 = sphi 0, %s109
      %s113 = sphi 0, %s112
      %s129 = sphi 0, %s113
    $region4: #{tpu_custom_call.1} parent=1 // loop_header_branch
      %18 = sbr.rel (%p16) target = $region8
    $region5: #{tpu_custom_call.1} parent=1 // loop_body
      %s20 = ssub.s32 %s15, 1
      %s21 = ssub.s32 %s15, 2
      %s28 = sadd.s32 1, %s23
      %p29 = scmp.ge.s32.totalorder %s28, 1
      %s30 = scalar_select %p29, 0, %s28
      %s31 = sadd.s32 1, %s22
      %s32 = scalar_select %p29, %s31, %s22
      %p33 = scmp.ge.s32.totalorder %s32, 2
      %s34 = scalar_select %p33, 0, %s32
      %s35 = ssub.s32 %s22, %s34
      %s36 = ssub.s32 %s23, %s30
      %s37 = sor.u32 %s35, %s36
      %p38 = scmp.eq.s32.totalorder %s37, 0
      %s40 = sadd.s32 %s39, 1
      %s41 = scalar_select %p38, %s39, %s40
      %p44 = pneg %p38
      %p45 = scmp.eq.s32.totalorder %s15, 1
      %p46 = por %p44, %p45
      %p47 = scmp.ne.s32.totalorder %s39, %s42
      %p48 = scmp.eq.s32.totalorder %s15, 0
      %p49 = por %p47, %p48
      %p50 = scmp.ne.s32.totalorder %s39, %s42
      %p51 = scmp.eq.s32.totalorder %s20, 1
      %p52 = por %p50, %p51
      %p53 = scmp.ne.s32.totalorder %s42, %s43
      %p54 = scmp.eq.s32.totalorder %s20, 0
      %p55 = por %p53, %p54
      %p56 = scmp.ne.s32.totalorder %s42, %s43
      %p57 = scmp.eq.s32.totalorder %s21, 1
      %p58 = por %p56, %p57
      %p60 = scmp.ne.s32.totalorder %s43, %s59
      %p61 = scmp.eq.s32.totalorder %s21, 0
      %p62 = por %p60, %p61
      %s64 = sadd.s32 %s63, 1
      %p67 = scmp.eq.s32.totalorder %s15, 1
      %p68 = scmp.ne.s32.totalorder %s63, %s65
      %p69 = scmp.eq.s32.totalorder %s15, 0
      %p70 = por %p68, %p69
      %p71 = scmp.ne.s32.totalorder %s63, %s65
      %p72 = scmp.eq.s32.totalorder %s20, 1
      %p73 = por %p71, %p72
      %p74 = scmp.ne.s32.totalorder %s65, %s66
      %p75 = scmp.eq.s32.totalorder %s20, 0
      %p76 = por %p74, %p75
      %p77 = scmp.ne.s32.totalorder %s65, %s66
      %p78 = scmp.eq.s32.totalorder %s21, 1
      %p79 = por %p77, %p78
      %p81 = scmp.ne.s32.totalorder %s66, %s80
      %p82 = scmp.eq.s32.totalorder %s21, 0
      %p83 = por %p81, %p82
      %s85 = sadd.s32 %s84, 1
      %p88 = scmp.eq.s32.totalorder %s15, 1
      %p89 = scmp.ne.s32.totalorder %s84, %s86
      %p90 = scmp.eq.s32.totalorder %s15, 0
      %p91 = por %p89, %p90
      %p92 = scmp.ne.s32.totalorder %s84, %s86
      %p93 = scmp.eq.s32.totalorder %s20, 1
      %p94 = por %p92, %p93
      %p95 = scmp.ne.s32.totalorder %s86, %s87
      %p96 = scmp.eq.s32.totalorder %s20, 0
      %p97 = por %p95, %p96
      %p98 = scmp.ne.s32.totalorder %s86, %s87
      %p99 = scmp.eq.s32.totalorder %s21, 1
      %p100 = por %p98, %p99
      %p102 = scmp.ne.s32.totalorder %s87, %s101
      %p103 = scmp.eq.s32.totalorder %s21, 0
      %p104 = por %p102, %p103
      %s105 = ssub.s32 %s22, %s34
      %s106 = ssub.s32 %s23, %s30
      %s107 = sor.u32 %s105, %s106
      %p108 = scmp.eq.s32.totalorder %s107, 0
      %s110 = sadd.s32 %s109, 1
      %s111 = scalar_select %p108, %s109, %s110
      %p114 = pneg %p108
      %p115 = scmp.eq.s32.totalorder %s15, 1
      %p116 = por %p114, %p115
      %p117 = scmp.ne.s32.totalorder %s109, %s112
      %p118 = scmp.eq.s32.totalorder %s15, 0
      %p119 = por %p117, %p118
      %p120 = scmp.ne.s32.totalorder %s109, %s112
      %p121 = scmp.eq.s32.totalorder %s20, 1
      %p122 = por %p120, %p121
      %p123 = scmp.ne.s32.totalorder %s112, %s113
      %p124 = scmp.eq.s32.totalorder %s20, 0
      %p125 = por %p123, %p124
      %p126 = scmp.ne.s32.totalorder %s112, %s113
      %p127 = scmp.eq.s32.totalorder %s21, 1
      %p128 = por %p126, %p127
      %p130 = scmp.ne.s32.totalorder %s113, %s129
      %p131 = scmp.eq.s32.totalorder %s21, 0
      %p132 = por %p130, %p131
      %p133 = scmp.le.s32.totalorder 1, %s15
      %p134 = scmp.lt.s32.totalorder %s15, 3
      %p135 = pnand %p133, %p134
      %p136 = pneg %p135
      // Predicated region
      $region9: #{tpu_custom_call.1} parent=5 // pred_check
        _
      $region10: #{tpu_custom_call.1} parent=5 // pred_check_branch
        %138 = sbr.rel (%p135) target = $region12
      $region11: #{tpu_custom_call.1} parent=5 // pred_region
        %s139 = ssub.s32 %s15, 1
        // Predicated region
        $region13: #{tpu_custom_call.1} parent=11 // pred_check
          %p140 = pneg %p76
        $region14: #{tpu_custom_call.1} parent=11 // pred_check_branch
          %142 = sbr.rel (%p140) target = $region16
        $region15: #{tpu_custom_call.1} parent=11 // pred_region
          _
        $region16: #{tpu_custom_call.1} parent=11 // pred_fallthru
          _
        // Predicated region
        $region17: #{tpu_custom_call.1} parent=11 // pred_check
          %p143 = pneg %p97
        $region18: #{tpu_custom_call.1} parent=11 // pred_check_branch
          %145 = sbr.rel (%p143) target = $region20
        $region19: #{tpu_custom_call.1} parent=11 // pred_region
          _
        $region20: #{tpu_custom_call.1} parent=11 // pred_fallthru
          _
      $region12: #{tpu_custom_call.1} parent=5 // pred_fallthru
        _
      %p146 = scmp.lt.s32.totalorder %s15, 2
      // Predicated region
      $region21: #{tpu_custom_call.1} parent=5 // pred_check
        %p147 = pneg %p146
      $region22: #{tpu_custom_call.1} parent=5 // pred_check_branch
        %149 = sbr.rel (%p147) target = $region24
      $region23: #{tpu_custom_call.1} parent=5 // pred_region
        // Predicated region
        $region25: #{tpu_custom_call.1} parent=23 // pred_check
          %p150 = pneg %p49
        $region26: #{tpu_custom_call.1} parent=23 // pred_check_branch
          %152 = sbr.rel (%p150) target = $region28
        $region27: #{tpu_custom_call.1} parent=23 // pred_region
          %s153 = sand.u32 %s39, 1
          %s154 = scalar_lea.sflag [#allocation3], %s153
          %s155 = sand.u32 %s39, 1
          %s156 = smul.addr %s155, 8
          %s157 = scalar_lea.vmem [#allocation2], %s156
          %s159 = ssub.s32 128, 128
          %160 = vsyncadd %s154, %s159
          %s161 = sadd.s32 %s23, %s22
          %s162 = smul.addr %s161, 128
          %s163 = scalar_lea.hbm %s0, %s162
          %s165 = sshll.u32 %s157, 4
          %s166 = int_to_ptr.vmem [resolvable:$true] %s165
          %168 = dma.hbm_to_vmem [thread:$0]  %s163, 128, %s166, %s154
        $region28: #{tpu_custom_call.1} parent=23 // pred_fallthru
          _
      $region24: #{tpu_custom_call.1} parent=5 // pred_fallthru
        _
      %p169 = scmp.le.s32.totalorder 1, %s15
      %p170 = scmp.lt.s32.totalorder %s15, 3
      %p171 = pnand %p169, %p170
      %p172 = pneg %p171
      // Predicated region
      $region29: #{tpu_custom_call.1} parent=5 // pred_check
        _
      $region30: #{tpu_custom_call.1} parent=5 // pred_check_branch
        %174 = sbr.rel (%p171) target = $region32
      $region31: #{tpu_custom_call.1} parent=5 // pred_region
        %s175 = ssub.s32 %s15, 1
        %s176 = sand.u32 %s42, 1
        %s177 = scalar_lea.sflag [#allocation3], %s176
        %s178 = sand.u32 %s42, 1
        %s179 = smul.addr %s178, 8
        %s180 = scalar_lea.vmem [#allocation2], %s179
        // Predicated region
        $region33: #{tpu_custom_call.1} parent=31 // pred_check
          %p181 = pneg %p55
        $region34: #{tpu_custom_call.1} parent=31 // pred_check_branch
          %183 = sbr.rel (%p181) target = $region36
        $region35: #{tpu_custom_call.1} parent=31 // pred_region
          %184 = dma.done %s177, 128
        $region36: #{tpu_custom_call.1} parent=31 // pred_fallthru
          _
        %s185 = sand.u32 %s42, 1
        %s186 = scalar_lea.sflag [#allocation3], %s185
        %s187 = sand.u32 %s42, 1
        %s188 = smul.addr %s187, 8
        %s189 = scalar_lea.vmem [#allocation2], %s188
        %p190 = pneg %p55
        %p191 = pneg %p52
        %p192 = pneg %p76
        %p193 = pneg %p73
        %p194 = pneg %p97
        %p195 = pneg %p94
        %p196 = pneg %p125
        %p197 = pneg %p122
        %s198 = sand.u32 %s112, 1
        %s199 = scalar_lea.sflag [#allocation4], %s198
        %s200 = sand.u32 %s112, 1
        %s201 = smul.addr %s200, 8
        %s202 = scalar_lea.vmem [#allocation5], %s201
        %v203 = vld [vmem:[%s180] sm:$0xff]
        %v204 = vmax.f32 %v203, 0.0
        %v205 = vld [vmem:[%s1] sm:$0xff]
        %v206 = vld [vmem:[%s2] sm:$0xff]
        %208 = vset.pattern.permute.xlu0 0
        %209 = vperm.xlu0 %208, %v206
        %v210 = vpop.permute.xlu0 %209
        %vm212 = vcmask 64512
        %v214 = vsel %vm212, %v205, 0
        %216 = vmatprep.subr.mxu0 0.0
        %217 = vmatpush1.msra.mxu0 %v204
        %218 = vmatprep.subr.mxu0 0.0
        %219 = vmatpush1.msra.mxu0 0.0
        %220 = vmatprep.subr.mxu0 0.0
        %221 = vmatpush1.msra.mxu0 0.0
        %222 = vmatprep.subr.mxu0 0.0
        %223 = vmatpush1.msra.mxu0 0.0
        %224 = vmatprep.subr.mxu0 0.0
        %225 = vmatpush1.msra.mxu0 0.0
        %226 = vmatprep.subr.mxu0 0.0
        %227 = vmatpush1.msra.mxu0 0.0
        %228 = vmatprep.subr.mxu0 0.0
        %229 = vmatpush1.msra.mxu0 0.0
        %230 = vmatprep.subr.mxu0 0.0
        %231 = vmatpush1.msra.mxu0 0.0
        %232 = vmatprep.subr.mxu0 0.0
        %233 = vmatpush1.msra.mxu0 0.0
        %234 = vmatprep.subr.mxu0 0.0
        %235 = vmatpush1.msra.mxu0 0.0
        %236 = vmatprep.subr.mxu0 0.0
        %237 = vmatpush1.msra.mxu0 0.0
        %238 = vmatprep.subr.mxu0 0.0
        %239 = vmatpush1.msra.mxu0 0.0
        %240 = vmatprep.subr.mxu0 0.0
        %241 = vmatpush1.msra.mxu0 0.0
        %242 = vmatprep.subr.mxu0 0.0
        %243 = vmatpush1.msra.mxu0 0.0
        %244 = vmatprep.subr.mxu0 0.0
        %245 = vmatpush1.msra.mxu0 0.0
        %246 = vmatprep.subr.mxu0 0.0
        %247 = vmatpush1.msra.mxu0 0.0
        %248 = vmatprep.subr.mxu0 0.0
        %249 = vmatpush1.msra.mxu0 0.0
        %250 = vmatprep.subr.mxu0 0.0
        %251 = vmatpush1.msra.mxu0 0.0
        %252 = vmatprep.subr.mxu0 0.0
        %253 = vmatpush1.msra.mxu0 0.0
        %254 = vmatprep.subr.mxu0 0.0
        %255 = vmatpush1.msra.mxu0 0.0
        %256 = vmatprep.subr.mxu0 0.0
        %257 = vmatpush1.msra.mxu0 0.0
        %258 = vmatprep.subr.mxu0 0.0
        %259 = vmatpush1.msra.mxu0 0.0
        %260 = vmatprep.subr.mxu0 0.0
        %261 = vmatpush1.msra.mxu0 0.0
        %262 = vmatprep.subr.mxu0 0.0
        %263 = vmatpush1.msra.mxu0 0.0
        %264 = vmatprep.subr.mxu0 0.0
        %265 = vmatpush1.msra.mxu0 0.0
        %266 = vmatprep.subr.mxu0 0.0
        %267 = vmatpush1.msra.mxu0 0.0
        %268 = vmatprep.subr.mxu0 0.0
        %269 = vmatpush1.msra.mxu0 0.0
        %270 = vmatprep.subr.mxu0 0.0
        %271 = vmatpush1.msra.mxu0 0.0
        %272 = vmatprep.subr.mxu0 0.0
        %273 = vmatpush1.msra.mxu0 0.0
        %274 = vmatprep.subr.mxu0 0.0
        %275 = vmatpush1.msra.mxu0 0.0
        %276 = vmatprep.subr.mxu0 0.0
        %277 = vmatpush1.msra.mxu0 0.0
        %278 = vmatprep.subr.mxu0 0.0
        %279 = vmatpush1.msra.mxu0 0.0
        %280 = vmatprep.mubr.f32.mxu0 0.0
        %281 = vmatmul.mubr.f32.gmra.mrb[0].mxu0 %v214
        %v282 = vpop.f32.mrb[0].mxu0
        %v283 = vadd.f32 %v210, %v282
        %v284 = vpop.f32.mrb[0].mxu0
        %285 = vdwg.mxu0
        %vm286 = vcmask 523264
        %287 = vst.msk [vmem:[%s202] sm:$0xff] %vm286, %v283
        %s288 = sand.u32 %s112, 1
        %s289 = scalar_lea.sflag [#allocation4], %s288
        %s290 = sand.u32 %s112, 1
        %s291 = smul.addr %s290, 8
        %s292 = scalar_lea.vmem [#allocation5], %s291
        // Predicated region
        $region37: #{tpu_custom_call.1} parent=31 // pred_check
          %p293 = pneg %p122
        $region38: #{tpu_custom_call.1} parent=31 // pred_check_branch
          %295 = sbr.rel (%p293) target = $region40
        $region39: #{tpu_custom_call.1} parent=31 // pred_region
          %s297 = ssub.s32 128, 128
          %298 = vsyncadd %s289, %s297
          %s299 = sadd.s32 %s25, %s24
          %s300 = smul.addr %s299, 128
          %s301 = scalar_lea.hbm %s3, %s300
          %s303 = sshll.u32 %s292, 4
          %s304 = int_to_ptr.vmem [resolvable:$true] %s303
          %306 = dma.vmem_to_hbm [thread:$0]  %s304, 128, %s301, %s289
        $region40: #{tpu_custom_call.1} parent=31 // pred_fallthru
          _
      $region32: #{tpu_custom_call.1} parent=5 // pred_fallthru
        _
      %p307 = scmp.le.s32.totalorder 2, %s15
      // Predicated region
      $region41: #{tpu_custom_call.1} parent=5 // pred_check
        %p308 = pneg %p307
      $region42: #{tpu_custom_call.1} parent=5 // pred_check_branch
        %310 = sbr.rel (%p308) target = $region44
      $region43: #{tpu_custom_call.1} parent=5 // pred_region
        %s311 = ssub.s32 %s15, 2
        // Predicated region
        $region45: #{tpu_custom_call.1} parent=43 // pred_check
          %p312 = pneg %p128
        $region46: #{tpu_custom_call.1} parent=43 // pred_check_branch
          %314 = sbr.rel (%p312) target = $region48
        $region47: #{tpu_custom_call.1} parent=43 // pred_region
          %s315 = sand.u32 %s113, 1
          %s316 = scalar_lea.sflag [#allocation4], %s315
          %s317 = sand.u32 %s113, 1
          %s318 = smul.addr %s317, 8
          %s319 = scalar_lea.vmem [#allocation5], %s318
          %320 = dma.done %s316, 128
        $region48: #{tpu_custom_call.1} parent=43 // pred_fallthru
          _
      $region44: #{tpu_custom_call.1} parent=5 // pred_fallthru
        _
    $region6: #{tpu_custom_call.1} parent=1 // loop_footer
      %s19 = sadd.s32 1, %s15
    $region7: #{tpu_custom_call.1} parent=1 // loop_footer_branch
      %14 = sbr.rel target = $region3
    $region8: #{tpu_custom_call.1} parent=1 // loop_exit
      _
    %321 = vsyncpa [#allocation3], 1
    %s322 = scalar_lea.sflag [#allocation3], 1
    %323 = vsyncpa %s322, 1
    %324 = vsyncpa [#allocation4], 1
    %s325 = scalar_lea.sflag [#allocation4], 1
    %326 = vsyncpa %s325, 1

</llo_original>
